<compile_context>
chip_gen: v6e
topology: v6e:2x2x1
jax: 0.10.0
libtpu: 0.0.40
codegen_flags: <defaults>
</compile_context>

<pallas_src>
import jax
import jax.numpy as jnp
from jax.experimental import pallas as pl
from jax.experimental.pallas import tpu as pltpu


def _round_up(x: int, m: int) -> int:
    return ((x + m - 1) // m) * m


def _mlp_kernel(x_ref, w1_ref, b1_ref, w2_ref, b2_ref, w3_ref, b3_ref, o_ref):
    cdt = w1_ref.dtype  # compute dtype of the MXU operands (f32 or bf16)
    x = x_ref[...].astype(cdt)
    h1 = jnp.dot(x, w1_ref[...], preferred_element_type=jnp.float32) + b1_ref[...]
    h1 = jnp.maximum(h1, 0.0)
    h2 = jnp.dot(h1.astype(cdt), w2_ref[...],
                 preferred_element_type=jnp.float32) + b2_ref[...]
    h2 = jnp.maximum(h2, 0.0)
    q = jnp.dot(h2.astype(cdt), w3_ref[...],
                preferred_element_type=jnp.float32) + b3_ref[...]
    o_ref[...] = q.astype(o_ref.dtype)


def prepare_params(params, *, weights_dtype=jnp.float32):
    """One-time conversion of raw params into the kernel layout.

    Weights: [in, out], cast to `weights_dtype` (bf16 halves weight DMA bytes;
    accumulation stays f32 inside the kernel).  Biases: [1, out], kept f32.
    Call this once (e.g. after each optimizer step), NOT on every forward.
    """
    w1, b1, w2, b2, w3, b3 = params
    cast_w = lambda w: jnp.asarray(w, weights_dtype)
    row_b = lambda b: jnp.asarray(b, jnp.float32).reshape(1, -1)
    return (cast_w(w1), row_b(b1), cast_w(w2), row_b(b2), cast_w(w3), row_b(b3))


def watkins_q_forward(states, prepared_params, *, block_b=512):
    """Pallas forward pass of WatkinsQ (== ActorNetwork MLP).

    states: [B, state_dims] float32
    prepared_params: output of prepare_params()
    returns: [B, num_actions] float32 Q-values
    """
    w1, b1, w2, b2, w3, b3 = prepared_params
    B, S = states.shape
    H = w1.shape[1]
    A = w3.shape[1]

    # Small-batch fast path: at get_actions-sized batches the fixed
    # pallas_call + pad + slice overhead exceeds the MLP compute.
    if B < 64:
        x = states.astype(jnp.float32)
        h1 = jnp.maximum(x @ w1.astype(jnp.float32) + b1, 0.0)
        h2 = jnp.maximum(h1 @ w2.astype(jnp.float32) + b2, 0.0)
        return h2 @ w3.astype(jnp.float32) + b3

    # Batch tiling: multiple of 8 sublanes, capped at block_b.  When there are
    # enough rows, force >= 2 grid steps so v7x's two TensorCores both work.
    rows = _round_up(B, 8)
    if rows >= 256:
        TB = min(block_b, _round_up((rows + 1) // 2, 8))
    else:
        TB = min(block_b, rows)
    BP = _round_up(rows, TB)

    xp = states.astype(jnp.float32)
    if BP != B:
        xp = jnp.pad(xp, ((0, BP - B), (0, 0)))  # extra rows are inert

    def pinned(shape):
        # Same block every grid step -> stays VMEM-resident, no re-DMA.
        return pl.BlockSpec(shape, lambda i: (0, 0))

    wbytes = w1.dtype.itemsize
    flops = 2 * BP * (S * H + H * H + H * A)
    bytes_accessed = (4 * (BP * S + 2 * H + A + BP * A)
                      + wbytes * (S * H + H * H + H * A))

    q = pl.pallas_call(
        _mlp_kernel,
        out_shape=jax.ShapeDtypeStruct((BP, A), jnp.float32),
        grid_spec=pltpu.PrefetchScalarGridSpec(
            num_scalar_prefetch=0,
            grid=(BP // TB,),
            in_specs=[
                pl.BlockSpec((TB, S), lambda i: (i, 0)),  # batch-tiled states
                pinned((S, H)),
                pinned((1, H)),
                pinned((H, H)),
                pinned((1, H)),
                pinned((H, A)),
                pinned((1, A)),
            ],
            out_specs=pl.BlockSpec((TB, A), lambda i: (i, 0)),
        ),
        compiler_params=pltpu.CompilerParams(
            dimension_semantics=("parallel",),  # v7x: shard batch over 2 TCs
        ),
        cost_estimate=pl.CostEstimate(
            flops=flops, transcendentals=0, bytes_accessed=bytes_accessed
        ),
    )(xp, w1, b1, w2, b2, w3, b3)

    return q[:B] if BP != B else q


def init_params(key, state_dims, hidden, num_actions):
    """Deterministic init mimicking nn.Linear's U(-1/sqrt(fan_in), 1/sqrt(fan_in)).

    Weights stored as [in_features, out_features] (transpose of PyTorch) so the
    kernel computes y = x @ W + b directly on the MXU; biases are [1, out] rows.
    """
    ks = jax.random.split(key, 6)

    def lin(kw, kb, fan_in, fan_out):
        bound = 1.0 / jnp.sqrt(jnp.float32(fan_in))
        w = jax.random.uniform(kw, (fan_in, fan_out), jnp.float32, -bound, bound)
        b = jax.random.uniform(kb, (1, fan_out), jnp.float32, -bound, bound)
        return w, b

    w1, b1 = lin(ks[0], ks[1], state_dims, hidden)
    w2, b2 = lin(ks[2], ks[3], hidden, hidden)
    w3, b3 = lin(ks[4], ks[5], hidden, num_actions)
    return (w1, b1, w2, b2, w3, b3)


def reference_forward(states, params):
    w1, b1, w2, b2, w3, b3 = params
    h1 = jnp.maximum(states @ w1 + b1, 0.0)
    h2 = jnp.maximum(h1 @ w2 + b2, 0.0)
    return h2 @ w3 + b3


if __name__ == "__main__":
    # Shapes consistent with the module: states of dim 4, hidden=32, 8 actions.
    # B=256 exercises the batch grid (2 steps of 128 -> both v7x TCs busy).
    B, STATE_DIMS, HIDDEN, NUM_ACTIONS = 256, 4, 32, 8

    key = jax.random.PRNGKey(0)
    k_x, k_p = jax.random.split(key)
    states = jax.random.normal(k_x, (B, STATE_DIMS), jnp.float32)
    params = init_params(k_p, STATE_DIMS, HIDDEN, NUM_ACTIONS)
    q_ref = reference_forward(states, params)

    # f32 weights: exact parity with the pure-JAX reference.
    prep_f32 = prepare_params(params, weights_dtype=jnp.float32)
    q = jax.block_until_ready(watkins_q_forward(states, prep_f32))
    assert q.shape == (B, NUM_ACTIONS)
    assert jnp.allclose(q, q_ref, atol=1e-5, rtol=1e-5)

    # bf16 weights: halved weight DMA bytes, f32 accumulation -> loose tolerance.
    prep_bf16 = prepare_params(params, weights_dtype=jnp.bfloat16)
    q16 = jax.block_until_ready(watkins_q_forward(states, prep_bf16))
    assert q16.shape == (B, NUM_ACTIONS)
    assert jnp.allclose(q16, q_ref, atol=5e-2, rtol=5e-2)

    # Small-batch fast path (get_actions-style).
    q1 = jax.block_until_ready(watkins_q_forward(states[:1], prep_f32))
    assert jnp.allclose(q1, q_ref[:1], atol=1e-5, rtol=1e-5)

    print("KERNEL_OK")
</pallas_src>

<mosaic_0001>
module attributes {stable_mosaic.version = 11 : i64} {
  func.func @_mlp_kernel(%arg0: i32, %arg1: memref<128x4xf32, #tpu.memory_space<vmem>>, %arg2: memref<4x32xf32, #tpu.memory_space<vmem>>, %arg3: memref<1x32xf32, #tpu.memory_space<vmem>>, %arg4: memref<32x32xf32, #tpu.memory_space<vmem>>, %arg5: memref<1x32xf32, #tpu.memory_space<vmem>>, %arg6: memref<32x8xf32, #tpu.memory_space<vmem>>, %arg7: memref<1x8xf32, #tpu.memory_space<vmem>>, %arg8: memref<128x8xf32, #tpu.memory_space<vmem>>) attributes {dimension_semantics = [#tpu.dimension_semantics<parallel>], iteration_bounds = array<i64: 2>, scalar_prefetch = 0 : i64, scratch_operands = 0 : i64, tpu.core_type = #tpu.core_type<tc>, window_params = [{transform_indices = @transform_0, window_bounds = array<i64: 128, 4>}, {pipeline_mode = #tpu.pipeline_mode<synchronous>, transform_indices = @transform_1, window_bounds = array<i64: 4, 32>}, {pipeline_mode = #tpu.pipeline_mode<synchronous>, transform_indices = @transform_2, window_bounds = array<i64: 1, 32>}, {pipeline_mode = #tpu.pipeline_mode<synchronous>, transform_indices = @transform_3, window_bounds = array<i64: 32, 32>}, {pipeline_mode = #tpu.pipeline_mode<synchronous>, transform_indices = @transform_4, window_bounds = array<i64: 1, 32>}, {pipeline_mode = #tpu.pipeline_mode<synchronous>, transform_indices = @transform_5, window_bounds = array<i64: 32, 8>}, {pipeline_mode = #tpu.pipeline_mode<synchronous>, transform_indices = @transform_6, window_bounds = array<i64: 1, 8>}, {transform_indices = @transform_7, window_bounds = array<i64: 128, 8>}]} {
    %c0 = arith.constant 0 : index
    %c0_0 = arith.constant 0 : index
    %0 = vector.load %arg1[%c0, %c0_0] : memref<128x4xf32, #tpu.memory_space<vmem>>, vector<128x4xf32>
    %c0_1 = arith.constant 0 : index
    %c0_2 = arith.constant 0 : index
    %1 = vector.load %arg2[%c0_1, %c0_2] : memref<4x32xf32, #tpu.memory_space<vmem>>, vector<4x32xf32>
    %cst = arith.constant dense<0.000000e+00> : vector<128x32xf32>
    %2 = tpu.matmul %0, %1, %cst {dimension_numbers = #tpu.dot_dimension_numbers<[1], [0], [0], [1], [0, 0, 1, 1], [], []>} : vector<128x4xf32>, vector<4x32xf32>, vector<128x32xf32> -> vector<128x32xf32>
    %c0_3 = arith.constant 0 : index
    %c0_4 = arith.constant 0 : index
    %3 = vector.load %arg3[%c0_3, %c0_4] : memref<1x32xf32, #tpu.memory_space<vmem>>, vector<1x32xf32>
    %4 = vector.broadcast %3 : vector<1x32xf32> to vector<128x32xf32>
    %5 = arith.addf %2, %4 : vector<128x32xf32>
    %cst_5 = arith.constant 0.000000e+00 : f32
    %6 = vector.broadcast %cst_5 : f32 to vector<128x32xf32>
    %7 = arith.maximumf %5, %6 : vector<128x32xf32>
    %c0_6 = arith.constant 0 : index
    %c0_7 = arith.constant 0 : index
    %8 = vector.load %arg4[%c0_6, %c0_7] : memref<32x32xf32, #tpu.memory_space<vmem>>, vector<32x32xf32>
    %cst_8 = arith.constant dense<0.000000e+00> : vector<128x32xf32>
    %9 = tpu.matmul %7, %8, %cst_8 {dimension_numbers = #tpu.dot_dimension_numbers<[1], [0], [0], [1], [0, 0, 1, 1], [], []>} : vector<128x32xf32>, vector<32x32xf32>, vector<128x32xf32> -> vector<128x32xf32>
    %c0_9 = arith.constant 0 : index
    %c0_10 = arith.constant 0 : index
    %10 = vector.load %arg5[%c0_9, %c0_10] : memref<1x32xf32, #tpu.memory_space<vmem>>, vector<1x32xf32>
    %11 = vector.broadcast %10 : vector<1x32xf32> to vector<128x32xf32>
    %12 = arith.addf %9, %11 : vector<128x32xf32>
    %cst_11 = arith.constant 0.000000e+00 : f32
    %13 = vector.broadcast %cst_11 : f32 to vector<128x32xf32>
    %14 = arith.maximumf %12, %13 : vector<128x32xf32>
    %c0_12 = arith.constant 0 : index
    %c0_13 = arith.constant 0 : index
    %15 = vector.load %arg6[%c0_12, %c0_13] : memref<32x8xf32, #tpu.memory_space<vmem>>, vector<32x8xf32>
    %cst_14 = arith.constant dense<0.000000e+00> : vector<128x8xf32>
    %16 = tpu.matmul %14, %15, %cst_14 {dimension_numbers = #tpu.dot_dimension_numbers<[1], [0], [0], [1], [0, 0, 1, 1], [], []>} : vector<128x32xf32>, vector<32x8xf32>, vector<128x8xf32> -> vector<128x8xf32>
    %c0_15 = arith.constant 0 : index
    %c0_16 = arith.constant 0 : index
    %17 = vector.load %arg7[%c0_15, %c0_16] : memref<1x8xf32, #tpu.memory_space<vmem>>, vector<1x8xf32>
    %18 = vector.broadcast %17 : vector<1x8xf32> to vector<128x8xf32>
    %19 = arith.addf %16, %18 : vector<128x8xf32>
    %c0_17 = arith.constant 0 : index
    %c0_18 = arith.constant 0 : index
    %20 = vector.load %arg8[%c0_17, %c0_18] : memref<128x8xf32, #tpu.memory_space<vmem>>, vector<128x8xf32>
    tpu.vector_store %arg8[%c0_17, %c0_18], %19 {strides = array<i32>} : memref<128x8xf32, #tpu.memory_space<vmem>>, vector<128x8xf32>,
    return
  }
  func.func @transform_0(%arg0: i32) -> (i32, i32) {
    %c0_i32 = arith.constant 0 : i32
    %c0_i32_0 = arith.constant 0 : i32
    return %arg0, %c0_i32 : i32, i32
  }
  func.func @transform_1(%arg0: i32) -> (i32, i32) {
    %c0_i32 = arith.constant 0 : i32
    %c0_i32_0 = arith.constant 0 : i32
    %c0_i32_1 = arith.constant 0 : i32
    return %c0_i32, %c0_i32_0 : i32, i32
  }
  func.func @transform_2(%arg0: i32) -> (i32, i32) {
    %c0_i32 = arith.constant 0 : i32
    %c0_i32_0 = arith.constant 0 : i32
    %c0_i32_1 = arith.constant 0 : i32
    return %c0_i32, %c0_i32_0 : i32, i32
  }
  func.func @transform_3(%arg0: i32) -> (i32, i32) {
    %c0_i32 = arith.constant 0 : i32
    %c0_i32_0 = arith.constant 0 : i32
    %c0_i32_1 = arith.constant 0 : i32
    return %c0_i32, %c0_i32_0 : i32, i32
  }
  func.func @transform_4(%arg0: i32) -> (i32, i32) {
    %c0_i32 = arith.constant 0 : i32
    %c0_i32_0 = arith.constant 0 : i32
    %c0_i32_1 = arith.constant 0 : i32
    return %c0_i32, %c0_i32_0 : i32, i32
  }
  func.func @transform_5(%arg0: i32) -> (i32, i32) {
    %c0_i32 = arith.constant 0 : i32
    %c0_i32_0 = arith.constant 0 : i32
    %c0_i32_1 = arith.constant 0 : i32
    return %c0_i32, %c0_i32_0 : i32, i32
  }
  func.func @transform_6(%arg0: i32) -> (i32, i32) {
    %c0_i32 = arith.constant 0 : i32
    %c0_i32_0 = arith.constant 0 : i32
    %c0_i32_1 = arith.constant 0 : i32
    return %c0_i32, %c0_i32_0 : i32, i32
  }
  func.func @transform_7(%arg0: i32) -> (i32, i32) {
    %c0_i32 = arith.constant 0 : i32
    %c0_i32_0 = arith.constant 0 : i32
    return %arg0, %c0_i32 : i32, i32
  }
}

</mosaic_0001>

<llo_original>
// kernel: tpu_custom_call.1
$region0: #{tpu_custom_call.1}
  #allocation0 [shape = 'u32[]', space=smem, size = 0x4, offset = 0x4, fixed_abs, tag = 'smem constant byte address 0x4 - core index']
  #allocation1 [shape = 'u32[144,128]{1,0:T(1,128)}', space=vmem, size = 0x12000, scoped, tag = 'internal scratch']
  %s0 = inlined_call_operand.vmem [shape: f32[256,4], index: 0, kind: input, shape index: {}]
  %s1 = inlined_call_operand.vmem [shape: f32[4,32], index: 1, kind: input, shape index: {}]
  %s2 = inlined_call_operand.vmem [shape: f32[1,32], index: 2, kind: input, shape index: {}]
  %s3 = inlined_call_operand.vmem [shape: f32[32,32], index: 3, kind: input, shape index: {}]
  %s4 = inlined_call_operand.vmem [shape: f32[1,32], index: 4, kind: input, shape index: {}]
  %s5 = inlined_call_operand.vmem [shape: f32[32,8], index: 5, kind: input, shape index: {}]
  %s6 = inlined_call_operand.vmem [shape: f32[1,8], index: 6, kind: input, shape index: {}]
  %s7 = inlined_call_operand.vmem [shape: f32[256,8], index: 7, kind: output, shape index: {}]
  %s8 = sld [smem:[#allocation0]]
  $region61: #{tpu_custom_call.1} parent=0
    _
  %s10 = ssub.s32 1, %s8
  %s11 = scalar_select 0, %s10, %s8
  loop: start=0, step=1, limit=4
  $region2: #{tpu_custom_call.1} parent=0 // loop_pre_header
    _
  $region3: #{tpu_custom_call.1} parent=0 // loop_header
    %s13 = sphi 0, %s17
    %p14 = scmp.ge.s32.totalorder %s13, 4
    %s23 = sphi 0, %s25
    %s26 = sphi 0, %s23
    %s27 = sphi 0, %s26
    %s43 = sphi 0, %s27
    %s47 = sphi 0, %s47
    %s49 = sphi 0, %s47
    %s50 = sphi 0, %s49
    %s64 = sphi 0, %s50
    %s68 = sphi 0, %s68
    %s70 = sphi 0, %s68
    %s71 = sphi 0, %s70
    %s85 = sphi 0, %s71
    %s89 = sphi 0, %s89
    %s91 = sphi 0, %s89
    %s92 = sphi 0, %s91
    %s106 = sphi 0, %s92
    %s110 = sphi 0, %s110
    %s112 = sphi 0, %s110
    %s113 = sphi 0, %s112
    %s127 = sphi 0, %s113
    %s131 = sphi 0, %s131
    %s133 = sphi 0, %s131
    %s134 = sphi 0, %s133
    %s148 = sphi 0, %s134
    %s152 = sphi 0, %s152
    %s154 = sphi 0, %s152
    %s155 = sphi 0, %s154
    %s169 = sphi 0, %s155
    %s175 = sphi 0, %s177
    %s178 = sphi 0, %s175
    %s179 = sphi 0, %s178
    %s195 = sphi 0, %s179
  $region4: #{tpu_custom_call.1} parent=0 // loop_header_branch
    %16 = sbr.rel (%p14) target = $region8
  $region5: #{tpu_custom_call.1} parent=0 // loop_body
    %s18 = ssub.s32 %s13, 1
    %s19 = ssub.s32 %s13, 2
    %s20 = sadd.s32 %s13, 1
    %s21 = ssub.s32 %s13, %s20
    %p22 = scmp.eq.s32.totalorder %s21, 0
    %s24 = sadd.s32 %s23, 1
    %s25 = scalar_select %p22, %s23, %s24
    %p28 = pneg %p22
    %p29 = scmp.eq.s32.totalorder %s13, 1
    %p30 = por %p28, %p29
    %p31 = scmp.ne.s32.totalorder %s23, %s26
    %p32 = scmp.eq.s32.totalorder %s13, 0
    %p33 = por %p31, %p32
    %p34 = scmp.ne.s32.totalorder %s23, %s26
    %p35 = scmp.eq.s32.totalorder %s18, 1
    %p36 = por %p34, %p35
    %p37 = scmp.ne.s32.totalorder %s26, %s27
    %p38 = scmp.eq.s32.totalorder %s18, 0
    %p39 = por %p37, %p38
    %p40 = scmp.ne.s32.totalorder %s26, %s27
    %p41 = scmp.eq.s32.totalorder %s19, 1
    %p42 = por %p40, %p41
    %p44 = scmp.ne.s32.totalorder %s27, %s43
    %p45 = scmp.eq.s32.totalorder %s19, 0
    %p46 = por %p44, %p45
    %s48 = sadd.s32 %s47, 1
    %p51 = scmp.eq.s32.totalorder %s13, 1
    %p52 = scmp.ne.s32.totalorder %s47, %s49
    %p53 = scmp.eq.s32.totalorder %s13, 0
    %p54 = por %p52, %p53
    %p55 = scmp.ne.s32.totalorder %s47, %s49
    %p56 = scmp.eq.s32.totalorder %s18, 1
    %p57 = por %p55, %p56
    %p58 = scmp.ne.s32.totalorder %s49, %s50
    %p59 = scmp.eq.s32.totalorder %s18, 0
    %p60 = por %p58, %p59
    %p61 = scmp.ne.s32.totalorder %s49, %s50
    %p62 = scmp.eq.s32.totalorder %s19, 1
    %p63 = por %p61, %p62
    %p65 = scmp.ne.s32.totalorder %s50, %s64
    %p66 = scmp.eq.s32.totalorder %s19, 0
    %p67 = por %p65, %p66
    %s69 = sadd.s32 %s68, 1
    %p72 = scmp.eq.s32.totalorder %s13, 1
    %p73 = scmp.ne.s32.totalorder %s68, %s70
    %p74 = scmp.eq.s32.totalorder %s13, 0
    %p75 = por %p73, %p74
    %p76 = scmp.ne.s32.totalorder %s68, %s70
    %p77 = scmp.eq.s32.totalorder %s18, 1
    %p78 = por %p76, %p77
    %p79 = scmp.ne.s32.totalorder %s70, %s71
    %p80 = scmp.eq.s32.totalorder %s18, 0
    %p81 = por %p79, %p80
    %p82 = scmp.ne.s32.totalorder %s70, %s71
    %p83 = scmp.eq.s32.totalorder %s19, 1
    %p84 = por %p82, %p83
    %p86 = scmp.ne.s32.totalorder %s71, %s85
    %p87 = scmp.eq.s32.totalorder %s19, 0
    %p88 = por %p86, %p87
    %s90 = sadd.s32 %s89, 1
    %p93 = scmp.eq.s32.totalorder %s13, 1
    %p94 = scmp.ne.s32.totalorder %s89, %s91
    %p95 = scmp.eq.s32.totalorder %s13, 0
    %p96 = por %p94, %p95
    %p97 = scmp.ne.s32.totalorder %s89, %s91
    %p98 = scmp.eq.s32.totalorder %s18, 1
    %p99 = por %p97, %p98
    %p100 = scmp.ne.s32.totalorder %s91, %s92
    %p101 = scmp.eq.s32.totalorder %s18, 0
    %p102 = por %p100, %p101
    %p103 = scmp.ne.s32.totalorder %s91, %s92
    %p104 = scmp.eq.s32.totalorder %s19, 1
    %p105 = por %p103, %p104
    %p107 = scmp.ne.s32.totalorder %s92, %s106
    %p108 = scmp.eq.s32.totalorder %s19, 0
    %p109 = por %p107, %p108
    %s111 = sadd.s32 %s110, 1
    %p114 = scmp.eq.s32.totalorder %s13, 1
    %p115 = scmp.ne.s32.totalorder %s110, %s112
    %p116 = scmp.eq.s32.totalorder %s13, 0
    %p117 = por %p115, %p116
    %p118 = scmp.ne.s32.totalorder %s110, %s112
    %p119 = scmp.eq.s32.totalorder %s18, 1
    %p120 = por %p118, %p119
    %p121 = scmp.ne.s32.totalorder %s112, %s113
    %p122 = scmp.eq.s32.totalorder %s18, 0
    %p123 = por %p121, %p122
    %p124 = scmp.ne.s32.totalorder %s112, %s113
    %p125 = scmp.eq.s32.totalorder %s19, 1
    %p126 = por %p124, %p125
    %p128 = scmp.ne.s32.totalorder %s113, %s127
    %p129 = scmp.eq.s32.totalorder %s19, 0
    %p130 = por %p128, %p129
    %s132 = sadd.s32 %s131, 1
    %p135 = scmp.eq.s32.totalorder %s13, 1
    %p136 = scmp.ne.s32.totalorder %s131, %s133
    %p137 = scmp.eq.s32.totalorder %s13, 0
    %p138 = por %p136, %p137
    %p139 = scmp.ne.s32.totalorder %s131, %s133
    %p140 = scmp.eq.s32.totalorder %s18, 1
    %p141 = por %p139, %p140
    %p142 = scmp.ne.s32.totalorder %s133, %s134
    %p143 = scmp.eq.s32.totalorder %s18, 0
    %p144 = por %p142, %p143
    %p145 = scmp.ne.s32.totalorder %s133, %s134
    %p146 = scmp.eq.s32.totalorder %s19, 1
    %p147 = por %p145, %p146
    %p149 = scmp.ne.s32.totalorder %s134, %s148
    %p150 = scmp.eq.s32.totalorder %s19, 0
    %p151 = por %p149, %p150
    %s153 = sadd.s32 %s152, 1
    %p156 = scmp.eq.s32.totalorder %s13, 1
    %p157 = scmp.ne.s32.totalorder %s152, %s154
    %p158 = scmp.eq.s32.totalorder %s13, 0
    %p159 = por %p157, %p158
    %p160 = scmp.ne.s32.totalorder %s152, %s154
    %p161 = scmp.eq.s32.totalorder %s18, 1
    %p162 = por %p160, %p161
    %p163 = scmp.ne.s32.totalorder %s154, %s155
    %p164 = scmp.eq.s32.totalorder %s18, 0
    %p165 = por %p163, %p164
    %p166 = scmp.ne.s32.totalorder %s154, %s155
    %p167 = scmp.eq.s32.totalorder %s19, 1
    %p168 = por %p166, %p167
    %p170 = scmp.ne.s32.totalorder %s155, %s169
    %p171 = scmp.eq.s32.totalorder %s19, 0
    %p172 = por %p170, %p171
    %s173 = ssub.s32 %s13, %s20
    %p174 = scmp.eq.s32.totalorder %s173, 0
    %s176 = sadd.s32 %s175, 1
    %s177 = scalar_select %p174, %s175, %s176
    %p180 = pneg %p174
    %p181 = scmp.eq.s32.totalorder %s13, 1
    %p182 = por %p180, %p181
    %p183 = scmp.ne.s32.totalorder %s175, %s178
    %p184 = scmp.eq.s32.totalorder %s13, 0
    %p185 = por %p183, %p184
    %p186 = scmp.ne.s32.totalorder %s175, %s178
    %p187 = scmp.eq.s32.totalorder %s18, 1
    %p188 = por %p186, %p187
    %p189 = scmp.ne.s32.totalorder %s178, %s179
    %p190 = scmp.eq.s32.totalorder %s18, 0
    %p191 = por %p189, %p190
    %p192 = scmp.ne.s32.totalorder %s178, %s179
    %p193 = scmp.eq.s32.totalorder %s19, 1
    %p194 = por %p192, %p193
    %p196 = scmp.ne.s32.totalorder %s179, %s195
    %p197 = scmp.eq.s32.totalorder %s19, 0
    %p198 = por %p196, %p197
    %p199 = scmp.le.s32.totalorder 1, %s13
    %p200 = scmp.lt.s32.totalorder %s13, 3
    %p201 = pnand %p199, %p200
    %p202 = pneg %p201
    // Predicated region
    $region9: #{tpu_custom_call.1} parent=5 // pred_check
      _
    $region10: #{tpu_custom_call.1} parent=5 // pred_check_branch
      %204 = sbr.rel (%p201) target = $region12
    $region11: #{tpu_custom_call.1} parent=5 // pred_region
      %s205 = ssub.s32 %s13, 1
      // Predicated region
      $region13: #{tpu_custom_call.1} parent=11 // pred_check
        %p206 = pneg %p60
      $region14: #{tpu_custom_call.1} parent=11 // pred_check_branch
        %208 = sbr.rel (%p206) target = $region16
      $region15: #{tpu_custom_call.1} parent=11 // pred_region
        _
      $region16: #{tpu_custom_call.1} parent=11 // pred_fallthru
        _
      // Predicated region
      $region17: #{tpu_custom_call.1} parent=11 // pred_check
        %p209 = pneg %p81
      $region18: #{tpu_custom_call.1} parent=11 // pred_check_branch
        %211 = sbr.rel (%p209) target = $region20
      $region19: #{tpu_custom_call.1} parent=11 // pred_region
        _
      $region20: #{tpu_custom_call.1} parent=11 // pred_fallthru
        _
      // Predicated region
      $region21: #{tpu_custom_call.1} parent=11 // pred_check
        %p212 = pneg %p102
      $region22: #{tpu_custom_call.1} parent=11 // pred_check_branch
        %214 = sbr.rel (%p212) target = $region24
      $region23: #{tpu_custom_call.1} parent=11 // pred_region
        _
      $region24: #{tpu_custom_call.1} parent=11 // pred_fallthru
        _
      // Predicated region
      $region25: #{tpu_custom_call.1} parent=11 // pred_check
        %p215 = pneg %p123
      $region26: #{tpu_custom_call.1} parent=11 // pred_check_branch
        %217 = sbr.rel (%p215) target = $region28
      $region27: #{tpu_custom_call.1} parent=11 // pred_region
        _
      $region28: #{tpu_custom_call.1} parent=11 // pred_fallthru
        _
      // Predicated region
      $region29: #{tpu_custom_call.1} parent=11 // pred_check
        %p218 = pneg %p144
      $region30: #{tpu_custom_call.1} parent=11 // pred_check_branch
        %220 = sbr.rel (%p218) target = $region32
      $region31: #{tpu_custom_call.1} parent=11 // pred_region
        _
      $region32: #{tpu_custom_call.1} parent=11 // pred_fallthru
        _
      // Predicated region
      $region33: #{tpu_custom_call.1} parent=11 // pred_check
        %p221 = pneg %p165
      $region34: #{tpu_custom_call.1} parent=11 // pred_check_branch
        %223 = sbr.rel (%p221) target = $region36
      $region35: #{tpu_custom_call.1} parent=11 // pred_region
        _
      $region36: #{tpu_custom_call.1} parent=11 // pred_fallthru
        _
    $region12: #{tpu_custom_call.1} parent=5 // pred_fallthru
      _
    %p224 = scmp.lt.s32.totalorder %s13, 2
    // Predicated region
    $region37: #{tpu_custom_call.1} parent=5 // pred_check
      %p225 = pneg %p224
    $region38: #{tpu_custom_call.1} parent=5 // pred_check_branch
      %227 = sbr.rel (%p225) target = $region40
    $region39: #{tpu_custom_call.1} parent=5 // pred_region
      // Predicated region
      $region41: #{tpu_custom_call.1} parent=39 // pred_check
        %p228 = pneg %p33
      $region42: #{tpu_custom_call.1} parent=39 // pred_check_branch
        %230 = sbr.rel (%p228) target = $region44
      $region43: #{tpu_custom_call.1} parent=39 // pred_region
        %s231 = smul.u32 16, %s13
        %p232 = scmp.lt.s32.totalorder %s231, 31
        %s233 = scalar_select %p232, %s231, 31
        %s234 = smul.addr %s233, 8
        %s235 = scalar_lea.vmem %s0, %s234
        %s236 = smul.u32 16, %s13
      $region44: #{tpu_custom_call.1} parent=39 // pred_fallthru
        _
    $region40: #{tpu_custom_call.1} parent=5 // pred_fallthru
      _
    %p237 = scmp.le.s32.totalorder 1, %s13
    %p238 = scmp.lt.s32.totalorder %s13, 3
    %p239 = pnand %p237, %p238
    %p240 = pneg %p239
    // Predicated region
    $region45: #{tpu_custom_call.1} parent=5 // pred_check
      _
    $region46: #{tpu_custom_call.1} parent=5 // pred_check_branch
      %242 = sbr.rel (%p239) target = $region48
    $region47: #{tpu_custom_call.1} parent=5 // pred_region
      %s243 = ssub.s32 %s13, 1
      %s244 = smul.u32 16, %s18
      %p245 = scmp.lt.s32.totalorder %s244, 31
      %s246 = scalar_select %p245, %s244, 31
      %s247 = smul.addr %s246, 8
      %s248 = scalar_lea.vmem %s0, %s247
      %p249 = pneg %p39
      %p250 = pneg %p36
      %p251 = pneg %p60
      %p252 = pneg %p57
      %p253 = pneg %p81
      %p254 = pneg %p78
      %p255 = pneg %p102
      %p256 = pneg %p99
      %p257 = pneg %p123
      %p258 = pneg %p120
      %p259 = pneg %p144
      %p260 = pneg %p141
      %p261 = pneg %p165
      %p262 = pneg %p162
      %p263 = pneg %p191
      %p264 = pneg %p188
      %s265 = smul.u32 16, %s18
      %p266 = scmp.lt.s32.totalorder %s265, 31
      %s267 = scalar_select %p266, %s265, 31
      %s268 = smul.addr %s267, 8
      %s269 = scalar_lea.vmem %s7, %s268
      %s270 = smul.u32 16, %s18
      %p271 = scmp.lt.s32.totalorder %s270, 31
      %s272 = scalar_select %p271, %s270, 31
      %s273 = smul.addr %s272, 8
      %s274 = scalar_lea.vmem %s0, %s273
      %s275 = smul.u32 16, %s18
      %s276 = smul.u32 16, %s18
      %p277 = scmp.lt.s32.totalorder %s276, 31
      %s278 = scalar_select %p277, %s276, 31
      %s279 = smul.addr %s278, 8
      %s280 = scalar_lea.vmem %s7, %s279
      %s281 = smul.u32 16, %s18
      %v282 = vld [vmem:[%s274] sm:$0xff]
      %v283 = vld [vmem:[%s274 + $0x8] sm:$0xff]
      %v284 = vld [vmem:[%s274 + $0x10] sm:$0xff]
      %v285 = vld [vmem:[%s274 + $0x18] sm:$0xff]
      %v286 = vld [vmem:[%s274 + $0x20] sm:$0xff]
      %v287 = vld [vmem:[%s274 + $0x28] sm:$0xff]
      %v288 = vld [vmem:[%s274 + $0x30] sm:$0xff]
      %v289 = vld [vmem:[%s274 + $0x38] sm:$0xff]
      %v290 = vld [vmem:[%s274 + $0x40] sm:$0xff]
      %v291 = vld [vmem:[%s274 + $0x48] sm:$0xff]
      %v292 = vld [vmem:[%s274 + $0x50] sm:$0xff]
      %v293 = vld [vmem:[%s274 + $0x58] sm:$0xff]
      %v294 = vld [vmem:[%s274 + $0x60] sm:$0xff]
      %v295 = vld [vmem:[%s274 + $0x68] sm:$0xff]
      %v296 = vld [vmem:[%s274 + $0x70] sm:$0xff]
      %v297 = vld [vmem:[%s274 + $0x78] sm:$0xff]
      %v298 = vld [vmem:[%s1] sm:$0xf]
      %v299 = vld [vmem:[%s2] sm:$0x1]
      %v301 = vlaneseq
      %v302 = vshrl.u32 %v301, 7
      %v303 = vsub.s32 0, %v302
      %v304 = vrot.slane %v299, %v303
      %vm306 = vcmask 31744
      %v308 = vsel %vm306, %v282, 0
      %v311 = vsel %vm306, %v283, 0
      %v314 = vsel %vm306, %v284, 0
      %v317 = vsel %vm306, %v285, 0
      %v320 = vsel %vm306, %v286, 0
      %v323 = vsel %vm306, %v287, 0
      %v326 = vsel %vm306, %v288, 0
      %v329 = vsel %vm306, %v289, 0
      %v332 = vsel %vm306, %v290, 0
      %v335 = vsel %vm306, %v291, 0
      %v338 = vsel %vm306, %v292, 0
      %v341 = vsel %vm306, %v293, 0
      %v344 = vsel %vm306, %v294, 0
      %v347 = vsel %vm306, %v295, 0
      %v350 = vsel %vm306, %v296, 0
      %v353 = vsel %vm306, %v297, 0
      %vm355 = vcmask 1043456
      %v357 = vsel %vm355, %v298, 0
      %359 = vmatprep.subr.mxu0 0.0
      %360 = vmatpush1.msra.mxu0 0.0
      %361 = vmatprep.subr.mxu0 0.0
      %362 = vmatpush1.msra.mxu0 0.0
      %363 = vmatprep.subr.mxu0 0.0
      %364 = vmatpush1.msra.mxu0 0.0
      %365 = vmatprep.subr.mxu0 0.0
      %366 = vmatpush1.msra.mxu0 0.0
      %367 = vmatprep.subr.mxu0 0.0
      %368 = vmatpush1.msra.mxu0 0.0
      %369 = vmatprep.subr.mxu0 0.0
      %370 = vmatpush1.msra.mxu0 0.0
      %371 = vmatprep.subr.mxu0 0.0
      %372 = vmatpush1.msra.mxu0 0.0
      %373 = vmatprep.subr.mxu0 0.0
      %374 = vmatpush1.msra.mxu0 0.0
      %375 = vmatprep.subr.mxu0 0.0
      %376 = vmatpush1.msra.mxu0 0.0
      %377 = vmatprep.subr.mxu0 0.0
      %378 = vmatpush1.msra.mxu0 0.0
      %379 = vmatprep.subr.mxu0 0.0
      %380 = vmatpush1.msra.mxu0 0.0
      %381 = vmatprep.subr.mxu0 0.0
      %382 = vmatpush1.msra.mxu0 0.0
      %383 = vmatprep.subr.mxu0 0.0
      %384 = vmatpush1.msra.mxu0 0.0
      %385 = vmatprep.subr.mxu0 0.0
      %386 = vmatpush1.msra.mxu0 0.0
      %387 = vmatprep.subr.mxu0 0.0
      %388 = vmatpush1.msra.mxu0 0.0
      %389 = vmatprep.subr.mxu0 0.0
      %390 = vmatpush1.msra.mxu0 %v357
      %391 = vmatprep.subr.mxu0 0.0
      %392 = vmatpush2.msra.mxu0 0.0
      %393 = vmatprep.subr.mxu0 0.0
      %394 = vmatpush2.msra.mxu0 0.0
      %395 = vmatprep.subr.mxu0 0.0
      %396 = vmatpush2.msra.mxu0 0.0
      %397 = vmatprep.subr.mxu0 0.0
      %398 = vmatpush2.msra.mxu0 0.0
      %399 = vmatprep.subr.mxu0 0.0
      %400 = vmatpush2.msra.mxu0 0.0
      %401 = vmatprep.subr.mxu0 0.0
      %402 = vmatpush2.msra.mxu0 0.0
      %403 = vmatprep.subr.mxu0 0.0
      %404 = vmatpush2.msra.mxu0 0.0
      %405 = vmatprep.subr.mxu0 0.0
      %406 = vmatpush2.msra.mxu0 0.0
      %407 = vmatprep.subr.mxu0 0.0
      %408 = vmatpush2.msra.mxu0 0.0
      %409 = vmatprep.subr.mxu0 0.0
      %410 = vmatpush2.msra.mxu0 0.0
      %411 = vmatprep.subr.mxu0 0.0
      %412 = vmatpush2.msra.mxu0 0.0
      %413 = vmatprep.subr.mxu0 0.0
      %414 = vmatpush2.msra.mxu0 0.0
      %415 = vmatprep.subr.mxu0 0.0
      %416 = vmatpush2.msra.mxu0 0.0
      %417 = vmatprep.subr.mxu0 0.0
      %418 = vmatpush2.msra.mxu0 0.0
      %419 = vmatprep.subr.mxu0 0.0
      %420 = vmatpush2.msra.mxu0 0.0
      %421 = vmatprep.subr.mxu0 0.0
      %422 = vmatpush2.msra.mxu0 0.0
      %423 = vmatprep.mubr.f32.mxu0 0.0
      %424 = vmatmul.mubr.f32.gmra.mxu0 %v308
      %v425 = vpop.f32.mrf.mxu0
      %v426 = vadd.f32 %v304, %v425
      %v427 = vpop.f32.mrf.mxu0
      %428 = vmatprep.mubr.f32.mxu0 0.0
      %429 = vmatmul.mubr.f32.gmra.mxu0 %v311
      %v430 = vpop.f32.mrf.mxu0
      %v431 = vadd.f32 %v304, %v430
      %v432 = vpop.f32.mrf.mxu0
      %433 = vmatprep.mubr.f32.mxu0 0.0
      %434 = vmatmul.mubr.f32.gmra.mxu0 %v314
      %v435 = vpop.f32.mrf.mxu0
      %v436 = vadd.f32 %v304, %v435
      %v437 = vpop.f32.mrf.mxu0
      %438 = vmatprep.mubr.f32.mxu0 0.0
      %439 = vmatmul.mubr.f32.gmra.mxu0 %v317
      %v440 = vpop.f32.mrf.mxu0
      %v441 = vadd.f32 %v304, %v440
      %v442 = vpop.f32.mrf.mxu0
      %443 = vmatprep.mubr.f32.mxu0 0.0
      %444 = vmatmul.mubr.f32.gmra.mxu0 %v320
      %v445 = vpop.f32.mrf.mxu0
      %v446 = vadd.f32 %v304, %v445
      %v447 = vpop.f32.mrf.mxu0
      %448 = vmatprep.mubr.f32.mxu0 0.0
      %449 = vmatmul.mubr.f32.gmra.mxu0 %v323
      %v450 = vpop.f32.mrf.mxu0
      %v451 = vadd.f32 %v304, %v450
      %v452 = vpop.f32.mrf.mxu0
      %453 = vmatprep.mubr.f32.mxu0 0.0
      %454 = vmatmul.mubr.f32.gmra.mxu0 %v326
      %v455 = vpop.f32.mrf.mxu0
      %v456 = vadd.f32 %v304, %v455
      %v457 = vpop.f32.mrf.mxu0
      %458 = vmatprep.mubr.f32.mxu0 0.0
      %459 = vmatmul.mubr.f32.gmra.mxu0 %v329
      %v460 = vpop.f32.mrf.mxu0
      %v461 = vadd.f32 %v304, %v460
      %v462 = vpop.f32.mrf.mxu0
      %463 = vmatprep.mubr.f32.mxu0 0.0
      %464 = vmatmul.mubr.f32.gmra.mxu0 %v332
      %v465 = vpop.f32.mrf.mxu0
      %v466 = vadd.f32 %v304, %v465
      %v467 = vpop.f32.mrf.mxu0
      %468 = vmatprep.mubr.f32.mxu0 0.0
      %469 = vmatmul.mubr.f32.gmra.mxu0 %v335
      %v470 = vpop.f32.mrf.mxu0
      %v471 = vadd.f32 %v304, %v470
      %v472 = vpop.f32.mrf.mxu0
      %473 = vmatprep.mubr.f32.mxu0 0.0
      %474 = vmatmul.mubr.f32.gmra.mxu0 %v338
      %v475 = vpop.f32.mrf.mxu0
      %v476 = vadd.f32 %v304, %v475
      %v477 = vpop.f32.mrf.mxu0
      %478 = vmatprep.mubr.f32.mxu0 0.0
      %479 = vmatmul.mubr.f32.gmra.mxu0 %v341
      %v480 = vpop.f32.mrf.mxu0
      %v481 = vadd.f32 %v304, %v480
      %v482 = vpop.f32.mrf.mxu0
      %483 = vmatprep.mubr.f32.mxu0 0.0
      %484 = vmatmul.mubr.f32.gmra.mxu0 %v344
      %v485 = vpop.f32.mrf.mxu0
      %v486 = vadd.f32 %v304, %v485
      %v487 = vpop.f32.mrf.mxu0
      %488 = vmatprep.mubr.f32.mxu0 0.0
      %489 = vmatmul.mubr.f32.gmra.mxu0 %v347
      %v490 = vpop.f32.mrf.mxu0
      %v491 = vadd.f32 %v304, %v490
      %v492 = vpop.f32.mrf.mxu0
      %493 = vmatprep.mubr.f32.mxu0 0.0
      %494 = vmatmul.mubr.f32.gmra.mxu0 %v350
      %v495 = vpop.f32.mrf.mxu0
      %v496 = vadd.f32 %v304, %v495
      %v497 = vpop.f32.mrf.mxu0
      %498 = vmatprep.mubr.f32.mxu0 0.0
      %499 = vmatmul.mubr.f32.gmra.mxu0 %v353
      %v500 = vpop.f32.mrf.mxu0
      %v501 = vadd.f32 %v304, %v500
      %v502 = vpop.f32.mrf.mxu0
      %503 = vdwg.mxu0
      %v504 = vmax.f32 %v426, 0.0
      %v505 = vmax.f32 %v431, 0.0
      %v506 = vmax.f32 %v436, 0.0
      %v507 = vmax.f32 %v441, 0.0
      %v508 = vmax.f32 %v446, 0.0
      %v509 = vmax.f32 %v451, 0.0
      %v510 = vmax.f32 %v456, 0.0
      %v511 = vmax.f32 %v461, 0.0
      %v512 = vmax.f32 %v466, 0.0
      %v513 = vmax.f32 %v471, 0.0
      %v514 = vmax.f32 %v476, 0.0
      %v515 = vmax.f32 %v481, 0.0
      %v516 = vmax.f32 %v486, 0.0
      %v517 = vmax.f32 %v491, 0.0
      %v518 = vmax.f32 %v496, 0.0
      %v519 = vmax.f32 %v501, 0.0
      %v520 = vld [vmem:[%s3] sm:$0xff]
      %v521 = vld [vmem:[%s3 + $0x8] sm:$0xff]
      %v522 = vld [vmem:[%s3 + $0x10] sm:$0xff]
      %v523 = vld [vmem:[%s3 + $0x18] sm:$0xff]
      %v524 = vld [vmem:[%s4] sm:$0x1]
      %v526 = vlaneseq
      %v527 = vshrl.u32 %v526, 7
      %v528 = vsub.s32 0, %v527
      %v529 = vrot.slane %v524, %v528
      %vm531 = vcmask 261120
      %v533 = vsel %vm531, %v504, 0
      %v536 = vsel %vm531, %v505, 0
      %v539 = vsel %vm531, %v506, 0
      %v542 = vsel %vm531, %v507, 0
      %v545 = vsel %vm531, %v508, 0
      %v548 = vsel %vm531, %v509, 0
      %v551 = vsel %vm531, %v510, 0
      %v554 = vsel %vm531, %v511, 0
      %v557 = vsel %vm531, %v512, 0
      %v560 = vsel %vm531, %v513, 0
      %v563 = vsel %vm531, %v514, 0
      %v566 = vsel %vm531, %v515, 0
      %v569 = vsel %vm531, %v516, 0
      %v572 = vsel %vm531, %v517, 0
      %v575 = vsel %vm531, %v518, 0
      %v578 = vsel %vm531, %v519, 0
      %580 = vmatprep.subr.mxu0 0.0
      %581 = vmatpush1.msra.mxu0 0.0
      %582 = vmatprep.subr.mxu0 0.0
      %583 = vmatpush1.msra.mxu0 0.0
      %584 = vmatprep.subr.mxu0 0.0
      %585 = vmatpush1.msra.mxu0 0.0
      %586 = vmatprep.subr.mxu0 0.0
      %587 = vmatpush1.msra.mxu0 0.0
      %588 = vmatprep.subr.mxu0 0.0
      %589 = vmatpush1.msra.mxu0 0.0
      %590 = vmatprep.subr.mxu0 0.0
      %591 = vmatpush1.msra.mxu0 0.0
      %592 = vmatprep.subr.mxu0 0.0
      %593 = vmatpush1.msra.mxu0 0.0
      %594 = vmatprep.subr.mxu0 0.0
      %595 = vmatpush1.msra.mxu0 0.0
      %596 = vmatprep.subr.mxu0 0.0
      %597 = vmatpush1.msra.mxu0 0.0
      %598 = vmatprep.subr.mxu0 0.0
      %599 = vmatpush1.msra.mxu0 0.0
      %600 = vmatprep.subr.mxu0 0.0
      %601 = vmatpush1.msra.mxu0 0.0
      %602 = vmatprep.subr.mxu0 0.0
      %603 = vmatpush1.msra.mxu0 0.0
      %604 = vmatprep.subr.mxu0 0.0
      %605 = vmatpush1.msra.mxu0 %v523
      %606 = vmatprep.subr.mxu0 0.0
      %607 = vmatpush1.msra.mxu0 %v522
      %608 = vmatprep.subr.mxu0 0.0
      %609 = vmatpush1.msra.mxu0 %v521
      %610 = vmatprep.subr.mxu0 0.0
      %611 = vmatpush1.msra.mxu0 %v520
      %612 = vmatprep.subr.mxu0 0.0
      %613 = vmatpush2.msra.mxu0 0.0
      %614 = vmatprep.subr.mxu0 0.0
      %615 = vmatpush2.msra.mxu0 0.0
      %616 = vmatprep.subr.mxu0 0.0
      %617 = vmatpush2.msra.mxu0 0.0
      %618 = vmatprep.subr.mxu0 0.0
      %619 = vmatpush2.msra.mxu0 0.0
      %620 = vmatprep.subr.mxu0 0.0
      %621 = vmatpush2.msra.mxu0 0.0
      %622 = vmatprep.subr.mxu0 0.0
      %623 = vmatpush2.msra.mxu0 0.0
      %624 = vmatprep.subr.mxu0 0.0
      %625 = vmatpush2.msra.mxu0 0.0
      %626 = vmatprep.subr.mxu0 0.0
      %627 = vmatpush2.msra.mxu0 0.0
      %628 = vmatprep.subr.mxu0 0.0
      %629 = vmatpush2.msra.mxu0 0.0
      %630 = vmatprep.subr.mxu0 0.0
      %631 = vmatpush2.msra.mxu0 0.0
      %632 = vmatprep.subr.mxu0 0.0
      %633 = vmatpush2.msra.mxu0 0.0
      %634 = vmatprep.subr.mxu0 0.0
      %635 = vmatpush2.msra.mxu0 0.0
      %636 = vmatprep.subr.mxu0 0.0
      %637 = vmatpush2.msra.mxu0 0.0
      %638 = vmatprep.subr.mxu0 0.0
      %639 = vmatpush2.msra.mxu0 0.0
      %640 = vmatprep.subr.mxu0 0.0
      %641 = vmatpush2.msra.mxu0 0.0
      %642 = vmatprep.subr.mxu0 0.0
      %643 = vmatpush2.msra.mxu0 0.0
      %644 = vmatprep.mubr.f32.mxu0 0.0
      %645 = vmatmul.mubr.f32.gmra.mxu0 %v533
      %v646 = vpop.f32.mrf.mxu0
      %v647 = vadd.f32 %v529, %v646
      %v648 = vpop.f32.mrf.mxu0
      %649 = vmatprep.mubr.f32.mxu0 0.0
      %650 = vmatmul.mubr.f32.gmra.mxu0 %v536
      %v651 = vpop.f32.mrf.mxu0
      %v652 = vadd.f32 %v529, %v651
      %v653 = vpop.f32.mrf.mxu0
      %654 = vmatprep.mubr.f32.mxu0 0.0
      %655 = vmatmul.mubr.f32.gmra.mxu0 %v539
      %v656 = vpop.f32.mrf.mxu0
      %v657 = vadd.f32 %v529, %v656
      %v658 = vpop.f32.mrf.mxu0
      %659 = vmatprep.mubr.f32.mxu0 0.0
      %660 = vmatmul.mubr.f32.gmra.mxu0 %v542
      %v661 = vpop.f32.mrf.mxu0
      %v662 = vadd.f32 %v529, %v661
      %v663 = vpop.f32.mrf.mxu0
      %664 = vmatprep.mubr.f32.mxu0 0.0
      %665 = vmatmul.mubr.f32.gmra.mxu0 %v545
      %v666 = vpop.f32.mrf.mxu0
      %v667 = vadd.f32 %v529, %v666
      %v668 = vpop.f32.mrf.mxu0
      %669 = vmatprep.mubr.f32.mxu0 0.0
      %670 = vmatmul.mubr.f32.gmra.mxu0 %v548
      %v671 = vpop.f32.mrf.mxu0
      %v672 = vadd.f32 %v529, %v671
      %v673 = vpop.f32.mrf.mxu0
      %674 = vmatprep.mubr.f32.mxu0 0.0
      %675 = vmatmul.mubr.f32.gmra.mxu0 %v551
      %v676 = vpop.f32.mrf.mxu0
      %v677 = vadd.f32 %v529, %v676
      %v678 = vpop.f32.mrf.mxu0
      %679 = vmatprep.mubr.f32.mxu0 0.0
      %680 = vmatmul.mubr.f32.gmra.mxu0 %v554
      %v681 = vpop.f32.mrf.mxu0
      %v682 = vadd.f32 %v529, %v681
      %v683 = vpop.f32.mrf.mxu0
      %684 = vmatprep.mubr.f32.mxu0 0.0
      %685 = vmatmul.mubr.f32.gmra.mxu0 %v557
      %v686 = vpop.f32.mrf.mxu0
      %v687 = vadd.f32 %v529, %v686
      %v688 = vpop.f32.mrf.mxu0
      %689 = vmatprep.mubr.f32.mxu0 0.0
      %690 = vmatmul.mubr.f32.gmra.mxu0 %v560
      %v691 = vpop.f32.mrf.mxu0
      %v692 = vadd.f32 %v529, %v691
      %v693 = vpop.f32.mrf.mxu0
      %694 = vmatprep.mubr.f32.mxu0 0.0
      %695 = vmatmul.mubr.f32.gmra.mxu0 %v563
      %v696 = vpop.f32.mrf.mxu0
      %v697 = vadd.f32 %v529, %v696
      %v698 = vpop.f32.mrf.mxu0
      %699 = vmatprep.mubr.f32.mxu0 0.0
      %700 = vmatmul.mubr.f32.gmra.mxu0 %v566
      %v701 = vpop.f32.mrf.mxu0
      %v702 = vadd.f32 %v529, %v701
      %v703 = vpop.f32.mrf.mxu0
      %704 = vmatprep.mubr.f32.mxu0 0.0
      %705 = vmatmul.mubr.f32.gmra.mxu0 %v569
      %v706 = vpop.f32.mrf.mxu0
      %v707 = vadd.f32 %v529, %v706
      %v708 = vpop.f32.mrf.mxu0
      %709 = vmatprep.mubr.f32.mxu0 0.0
      %710 = vmatmul.mubr.f32.gmra.mxu0 %v572
      %v711 = vpop.f32.mrf.mxu0
      %v712 = vadd.f32 %v529, %v711
      %v713 = vpop.f32.mrf.mxu0
      %714 = vmatprep.mubr.f32.mxu0 0.0
      %715 = vmatmul.mubr.f32.gmra.mxu0 %v575
      %v716 = vpop.f32.mrf.mxu0
      %v717 = vadd.f32 %v529, %v716
      %v718 = vpop.f32.mrf.mxu0
      %719 = vmatprep.mubr.f32.mxu0 0.0
      %720 = vmatmul.mubr.f32.gmra.mxu0 %v578
      %v721 = vpop.f32.mrf.mxu0
      %v722 = vadd.f32 %v529, %v721
      %v723 = vpop.f32.mrf.mxu0
      %724 = vdwg.mxu0
      %v725 = vmax.f32 %v647, 0.0
      %v726 = vmax.f32 %v652, 0.0
      %v727 = vmax.f32 %v657, 0.0
      %v728 = vmax.f32 %v662, 0.0
      %v729 = vmax.f32 %v667, 0.0
      %v730 = vmax.f32 %v672, 0.0
      %v731 = vmax.f32 %v677, 0.0
      %v732 = vmax.f32 %v682, 0.0
      %v733 = vmax.f32 %v687, 0.0
      %v734 = vmax.f32 %v692, 0.0
      %v735 = vmax.f32 %v697, 0.0
      %v736 = vmax.f32 %v702, 0.0
      %v737 = vmax.f32 %v707, 0.0
      %v738 = vmax.f32 %v712, 0.0
      %v739 = vmax.f32 %v717, 0.0
      %v740 = vmax.f32 %v722, 0.0
      %v741 = vld [vmem:[%s5] sm:$0xff]
      %v742 = vld [vmem:[%s5 + $0x8] sm:$0xff]
      %v743 = vld [vmem:[%s5 + $0x10] sm:$0xff]
      %v744 = vld [vmem:[%s5 + $0x18] sm:$0xff]
      %v745 = vld [vmem:[%s6] sm:$0x1]
      %v747 = vlaneseq
      %v748 = vshrl.u32 %v747, 7
      %v749 = vsub.s32 0, %v748
      %v750 = vrot.slane %v745, %v749
      %v753 = vsel %vm531, %v725, 0
      %v756 = vsel %vm531, %v726, 0
      %v759 = vsel %vm531, %v727, 0
      %v762 = vsel %vm531, %v728, 0
      %v765 = vsel %vm531, %v729, 0
      %v768 = vsel %vm531, %v730, 0
      %v771 = vsel %vm531, %v731, 0
      %v774 = vsel %vm531, %v732, 0
      %v777 = vsel %vm531, %v733, 0
      %v780 = vsel %vm531, %v734, 0
      %v783 = vsel %vm531, %v735, 0
      %v786 = vsel %vm531, %v736, 0
      %v789 = vsel %vm531, %v737, 0
      %v792 = vsel %vm531, %v738, 0
      %v795 = vsel %vm531, %v739, 0
      %v798 = vsel %vm531, %v740, 0
      %800 = vmatprep.subr.mxu0 0.0
      %801 = vmatpush1.msra.mxu0 0.0
      %802 = vmatprep.subr.mxu0 0.0
      %803 = vmatpush1.msra.mxu0 0.0
      %804 = vmatprep.subr.mxu0 0.0
      %805 = vmatpush1.msra.mxu0 0.0
      %806 = vmatprep.subr.mxu0 0.0
      %807 = vmatpush1.msra.mxu0 0.0
      %808 = vmatprep.subr.mxu0 0.0
      %809 = vmatpush1.msra.mxu0 0.0
      %810 = vmatprep.subr.mxu0 0.0
      %811 = vmatpush1.msra.mxu0 0.0
      %812 = vmatprep.subr.mxu0 0.0
      %813 = vmatpush1.msra.mxu0 0.0
      %814 = vmatprep.subr.mxu0 0.0
      %815 = vmatpush1.msra.mxu0 0.0
      %816 = vmatprep.subr.mxu0 0.0
      %817 = vmatpush1.msra.mxu0 0.0
      %818 = vmatprep.subr.mxu0 0.0
      %819 = vmatpush1.msra.mxu0 0.0
      %820 = vmatprep.subr.mxu0 0.0
      %821 = vmatpush1.msra.mxu0 0.0
      %822 = vmatprep.subr.mxu0 0.0
      %823 = vmatpush1.msra.mxu0 0.0
      %824 = vmatprep.subr.mxu0 0.0
      %825 = vmatpush1.msra.mxu0 %v744
      %826 = vmatprep.subr.mxu0 0.0
      %827 = vmatpush1.msra.mxu0 %v743
      %828 = vmatprep.subr.mxu0 0.0
      %829 = vmatpush1.msra.mxu0 %v742
      %830 = vmatprep.subr.mxu0 0.0
      %831 = vmatpush1.msra.mxu0 %v741
      %832 = vmatprep.subr.mxu0 0.0
      %833 = vmatpush2.msra.mxu0 0.0
      %834 = vmatprep.subr.mxu0 0.0
      %835 = vmatpush2.msra.mxu0 0.0
      %836 = vmatprep.subr.mxu0 0.0
      %837 = vmatpush2.msra.mxu0 0.0
      %838 = vmatprep.subr.mxu0 0.0
      %839 = vmatpush2.msra.mxu0 0.0
      %840 = vmatprep.subr.mxu0 0.0
      %841 = vmatpush2.msra.mxu0 0.0
      %842 = vmatprep.subr.mxu0 0.0
      %843 = vmatpush2.msra.mxu0 0.0
      %844 = vmatprep.subr.mxu0 0.0
      %845 = vmatpush2.msra.mxu0 0.0
      %846 = vmatprep.subr.mxu0 0.0
      %847 = vmatpush2.msra.mxu0 0.0
      %848 = vmatprep.subr.mxu0 0.0
      %849 = vmatpush2.msra.mxu0 0.0
      %850 = vmatprep.subr.mxu0 0.0
      %851 = vmatpush2.msra.mxu0 0.0
      %852 = vmatprep.subr.mxu0 0.0
      %853 = vmatpush2.msra.mxu0 0.0
      %854 = vmatprep.subr.mxu0 0.0
      %855 = vmatpush2.msra.mxu0 0.0
      %856 = vmatprep.subr.mxu0 0.0
      %857 = vmatpush2.msra.mxu0 0.0
      %858 = vmatprep.subr.mxu0 0.0
      %859 = vmatpush2.msra.mxu0 0.0
      %860 = vmatprep.subr.mxu0 0.0
      %861 = vmatpush2.msra.mxu0 0.0
      %862 = vmatprep.subr.mxu0 0.0
      %863 = vmatpush2.msra.mxu0 0.0
      %864 = vmatprep.mubr.f32.mxu0 0.0
      %865 = vmatmul.mubr.f32.gmra.mxu0 %v753
      %v866 = vpop.f32.mrf.mxu0
      %v867 = vadd.f32 %v750, %v866
      %v868 = vpop.f32.mrf.mxu0
      %869 = vmatprep.mubr.f32.mxu0 0.0
      %870 = vmatmul.mubr.f32.gmra.mxu0 %v756
      %v871 = vpop.f32.mrf.mxu0
      %v872 = vadd.f32 %v750, %v871
      %v873 = vpop.f32.mrf.mxu0
      %874 = vmatprep.mubr.f32.mxu0 0.0
      %875 = vmatmul.mubr.f32.gmra.mxu0 %v759
      %v876 = vpop.f32.mrf.mxu0
      %v877 = vadd.f32 %v750, %v876
      %v878 = vpop.f32.mrf.mxu0
      %879 = vmatprep.mubr.f32.mxu0 0.0
      %880 = vmatmul.mubr.f32.gmra.mxu0 %v762
      %v881 = vpop.f32.mrf.mxu0
      %v882 = vadd.f32 %v750, %v881
      %v883 = vpop.f32.mrf.mxu0
      %884 = vmatprep.mubr.f32.mxu0 0.0
      %885 = vmatmul.mubr.f32.gmra.mxu0 %v765
      %v886 = vpop.f32.mrf.mxu0
      %v887 = vadd.f32 %v750, %v886
      %v888 = vpop.f32.mrf.mxu0
      %889 = vmatprep.mubr.f32.mxu0 0.0
      %890 = vmatmul.mubr.f32.gmra.mxu0 %v768
      %v891 = vpop.f32.mrf.mxu0
      %v892 = vadd.f32 %v750, %v891
      %v893 = vpop.f32.mrf.mxu0
      %894 = vmatprep.mubr.f32.mxu0 0.0
      %895 = vmatmul.mubr.f32.gmra.mxu0 %v771
      %v896 = vpop.f32.mrf.mxu0
      %v897 = vadd.f32 %v750, %v896
      %v898 = vpop.f32.mrf.mxu0
      %899 = vmatprep.mubr.f32.mxu0 0.0
      %900 = vmatmul.mubr.f32.gmra.mxu0 %v774
      %v901 = vpop.f32.mrf.mxu0
      %v902 = vadd.f32 %v750, %v901
      %v903 = vpop.f32.mrf.mxu0
      %904 = vmatprep.mubr.f32.mxu0 0.0
      %905 = vmatmul.mubr.f32.gmra.mxu0 %v777
      %v906 = vpop.f32.mrf.mxu0
      %v907 = vadd.f32 %v750, %v906
      %v908 = vpop.f32.mrf.mxu0
      %909 = vmatprep.mubr.f32.mxu0 0.0
      %910 = vmatmul.mubr.f32.gmra.mxu0 %v780
      %v911 = vpop.f32.mrf.mxu0
      %v912 = vadd.f32 %v750, %v911
      %v913 = vpop.f32.mrf.mxu0
      %914 = vmatprep.mubr.f32.mxu0 0.0
      %915 = vmatmul.mubr.f32.gmra.mxu0 %v783
      %v916 = vpop.f32.mrf.mxu0
      %v917 = vadd.f32 %v750, %v916
      %v918 = vpop.f32.mrf.mxu0
      %919 = vmatprep.mubr.f32.mxu0 0.0
      %920 = vmatmul.mubr.f32.gmra.mxu0 %v786
      %v921 = vpop.f32.mrf.mxu0
      %v922 = vadd.f32 %v750, %v921
      %v923 = vpop.f32.mrf.mxu0
      %924 = vmatprep.mubr.f32.mxu0 0.0
      %925 = vmatmul.mubr.f32.gmra.mxu0 %v789
      %v926 = vpop.f32.mrf.mxu0
      %v927 = vadd.f32 %v750, %v926
      %v928 = vpop.f32.mrf.mxu0
      %929 = vmatprep.mubr.f32.mxu0 0.0
      %930 = vmatmul.mubr.f32.gmra.mxu0 %v792
      %v931 = vpop.f32.mrf.mxu0
      %v932 = vadd.f32 %v750, %v931
      %v933 = vpop.f32.mrf.mxu0
      %934 = vmatprep.mubr.f32.mxu0 0.0
      %935 = vmatmul.mubr.f32.gmra.mxu0 %v795
      %v936 = vpop.f32.mrf.mxu0
      %v937 = vadd.f32 %v750, %v936
      %v938 = vpop.f32.mrf.mxu0
      %939 = vmatprep.mubr.f32.mxu0 0.0
      %940 = vmatmul.mubr.f32.gmra.mxu0 %v798
      %v941 = vpop.f32.mrf.mxu0
      %v942 = vadd.f32 %v750, %v941
      %v943 = vpop.f32.mrf.mxu0
      %944 = vdwg.mxu0
      %vm945 = vcmask 64512
      %946 = vst.msk [vmem:[%s280] sm:$0xff] %vm945, %v867
      %947 = vst.msk [vmem:[%s280 + $0x8] sm:$0xff] %vm945, %v872
      %948 = vst.msk [vmem:[%s280 + $0x10] sm:$0xff] %vm945, %v877
      %949 = vst.msk [vmem:[%s280 + $0x18] sm:$0xff] %vm945, %v882
      %950 = vst.msk [vmem:[%s280 + $0x20] sm:$0xff] %vm945, %v887
      %951 = vst.msk [vmem:[%s280 + $0x28] sm:$0xff] %vm945, %v892
      %952 = vst.msk [vmem:[%s280 + $0x30] sm:$0xff] %vm945, %v897
      %953 = vst.msk [vmem:[%s280 + $0x38] sm:$0xff] %vm945, %v902
      %954 = vst.msk [vmem:[%s280 + $0x40] sm:$0xff] %vm945, %v907
      %955 = vst.msk [vmem:[%s280 + $0x48] sm:$0xff] %vm945, %v912
      %956 = vst.msk [vmem:[%s280 + $0x50] sm:$0xff] %vm945, %v917
      %957 = vst.msk [vmem:[%s280 + $0x58] sm:$0xff] %vm945, %v922
      %958 = vst.msk [vmem:[%s280 + $0x60] sm:$0xff] %vm945, %v927
      %959 = vst.msk [vmem:[%s280 + $0x68] sm:$0xff] %vm945, %v932
      %960 = vst.msk [vmem:[%s280 + $0x70] sm:$0xff] %vm945, %v937
      %961 = vst.msk [vmem:[%s280 + $0x78] sm:$0xff] %vm945, %v942
      %s962 = smul.u32 16, %s18
      %p963 = scmp.lt.s32.totalorder %s962, 31
      %s964 = scalar_select %p963, %s962, 31
      %s965 = smul.addr %s964, 8
      %s966 = scalar_lea.vmem %s7, %s965
      // Predicated region
      $region49: #{tpu_custom_call.1} parent=47 // pred_check
        %p967 = pneg %p188
      $region50: #{tpu_custom_call.1} parent=47 // pred_check_branch
        %969 = sbr.rel (%p967) target = $region52
      $region51: #{tpu_custom_call.1} parent=47 // pred_region
        %s970 = smul.u32 16, %s18
      $region52: #{tpu_custom_call.1} parent=47 // pred_fallthru
        _
    $region48: #{tpu_custom_call.1} parent=5 // pred_fallthru
      _
    %p971 = scmp.le.s32.totalorder 2, %s13
    // Predicated region
    $region53: #{tpu_custom_call.1} parent=5 // pred_check
      %p972 = pneg %p971
    $region54: #{tpu_custom_call.1} parent=5 // pred_check_branch
      %974 = sbr.rel (%p972) target = $region56
    $region55: #{tpu_custom_call.1} parent=5 // pred_region
      %s975 = ssub.s32 %s13, 2
      // Predicated region
      $region57: #{tpu_custom_call.1} parent=55 // pred_check
        %p976 = pneg %p194
      $region58: #{tpu_custom_call.1} parent=55 // pred_check_branch
        %978 = sbr.rel (%p976) target = $region60
      $region59: #{tpu_custom_call.1} parent=55 // pred_region
        %s979 = smul.u32 16, %s19
        %p980 = scmp.lt.s32.totalorder %s979, 31
        %s981 = scalar_select %p980, %s979, 31
        %s982 = smul.addr %s981, 8
        %s983 = scalar_lea.vmem %s7, %s982
      $region60: #{tpu_custom_call.1} parent=55 // pred_fallthru
        _
    $region56: #{tpu_custom_call.1} parent=5 // pred_fallthru
      _
  $region6: #{tpu_custom_call.1} parent=0 // loop_footer
    %s17 = sadd.s32 1, %s13
  $region7: #{tpu_custom_call.1} parent=0 // loop_footer_branch
    %12 = sbr.rel target = $region3
  $region8: #{tpu_custom_call.1} parent=0 // loop_exit
    _

</llo_original>
